<compile_context>
chip_gen: v5e
topology: v5e:2x2
jax: 0.10.0
libtpu: 0.0.40
codegen_flags: <defaults>
</compile_context>

<pallas_src>
import jax
import jax.numpy as jnp
from jax import lax
from jax.experimental import pallas as pl
from jax.experimental.pallas import tpu as pltpu


def _accumulate_channels(x_ref, w_ref, n, shape):
    """sum_c w[c] * x[n, c]  as a dense f32 (TH, TW) tile."""
    C = x_ref.shape[1]
    if C <= 64:
        # Small/medium C: fully unrolled scalar-weight FMA chain.
        acc = jnp.zeros(shape, jnp.float32)
        for c in range(C):
            acc = acc + w_ref[c] * x_ref[n, c].astype(jnp.float32)
        return acc
    # Large C: bounded-codegen loop with independent accumulator chains so a
    # single serial add chain does not gate the VALU slots and trace-time
    # unrolling stays small.
    NACC = 4
    steps = C // NACC

    def body(i, accs):
        c0 = i * NACC
        return tuple(
            accs[k] + w_ref[c0 + k] * x_ref[n, c0 + k].astype(jnp.float32)
            for k in range(NACC)
        )

    init = tuple(jnp.zeros(shape, jnp.float32) for _ in range(NACC))
    accs = lax.fori_loop(0, steps, body, init, unroll=2)
    acc = (accs[0] + accs[1]) + (accs[2] + accs[3])
    for c in range(steps * NACC, C):  # ragged tail (< NACC channels)
        acc = acc + w_ref[c] * x_ref[n, c].astype(jnp.float32)
    return acc


def convsig_kernel(x_ref, w_ref, b_ref, o_ref):
    # x_ref: (TN, C, TH, TW) VMEM block, spatial dims on (sublane, lane).
    # w_ref: (C,) f32 weights in SMEM (scalar reads).
    # b_ref: (1,) f32 bias in SMEM (scalar read).
    # o_ref: (TN, TH, TW) dense output block.
    TN, C, TH, TW = x_ref.shape
    for n in range(TN):  # TN <= 8 (batch folding only for tiny problems)
        acc = _accumulate_channels(x_ref, w_ref, n, (TH, TW)) + b_ref[0]
        # sigmoid(x) == 0.5 * tanh(0.5 * x) + 0.5 : one EUP op per vreg.
        o_ref[n] = (0.5 * jnp.tanh(0.5 * acc) + 0.5).astype(o_ref.dtype)


def _block_budget_bytes():
    """Per-grid-step input-block byte budget, generation aware."""
    try:
        vmem = pltpu.get_tpu_info().vmem_capacity_bytes
    except Exception:
        vmem = None
    if vmem is not None and vmem <= (64 << 20):
        # v7x: ~3.2 TB/s HBM per TC but only 64 MiB VMEM -> ~10 MiB blocks.
        return 10 << 20
    # v5e / v6e: 128 MiB VMEM; ~6 MiB blocks already amortize the ~0.35 us
    # per-grid-step overhead at their HBM bandwidth.
    return 6 << 20


def conv_sig(x_nchw, weight, bias):
    """1x1 Conv2d(in_ch -> 1) + Sigmoid.

    x_nchw: (N, C, H, W); weight: (1, C, 1, 1); bias: (1,).
    Returns (N, 1, H, W) in x's dtype.
    """
    N, C, H, W = x_nchw.shape
    itemsize = jnp.dtype(x_nchw.dtype).itemsize
    LANE = 128
    SUB = max(8, 32 // itemsize)  # sublane granularity: 8 f32 / 16 bf16

    budget = _block_budget_bytes()

    # --- lane (W) tile: full W when cheap, else a multiple of 128 ----------
    if W <= LANE or C * SUB * W * itemsize <= budget:
        TW = W
    else:
        max_lanes = max(LANE, ((budget // (C * SUB * itemsize)) // LANE) * LANE)
        TW = min(max_lanes, (W // LANE) * LANE)

    # --- sublane (H) tile: multiple of SUB, or full H -----------------------
    th_budget = max(SUB, budget // max(C * TW * itemsize, 1))
    if H <= th_budget:
        TH = H
    else:
        TH = max(SUB, (th_budget // SUB) * SUB)

    # --- batch folding for small problems -----------------------------------
    TN = 1
    if TH == H and TW == W and N > 1:
        per_sample = C * H * W * itemsize
        TN = int(min(N, max(1, budget // max(per_sample, 1)), 8))
        if TN >= N:  # keep >= 2 grid steps so both v7x TensorCores get work
            TN = max(1, N // 2)
        while N % TN:
            TN -= 1

    grid = (N // TN, pl.cdiv(H, TH), pl.cdiv(W, TW))

    w1d = weight.reshape(C).astype(jnp.float32)
    b1d = bias.reshape(1).astype(jnp.float32)

    # VMEM limit sized from the actual double-buffered block footprint, with
    # headroom, capped safely under every generation's physical VMEM.
    in_blk = TN * C * TH * TW * itemsize
    out_blk = TN * TH * TW * itemsize
    vmem_limit = int(min(48 << 20, max(16 << 20, 2 * (in_blk + out_blk) + (2 << 20))))

    out3 = pl.pallas_call(
        convsig_kernel,
        out_shape=jax.ShapeDtypeStruct((N, H, W), x_nchw.dtype),
        grid_spec=pltpu.PrefetchScalarGridSpec(
            num_scalar_prefetch=0,
            grid=grid,
            in_specs=[
                pl.BlockSpec((TN, C, TH, TW), lambda n, i, j: (n, 0, i, j)),
                pl.BlockSpec(memory_space=pltpu.MemorySpace.SMEM),
                pl.BlockSpec(memory_space=pltpu.MemorySpace.SMEM),
            ],
            out_specs=pl.BlockSpec((TN, TH, TW), lambda n, i, j: (n, i, j)),
        ),
        compiler_params=pltpu.CompilerParams(
            dimension_semantics=("parallel", "parallel", "parallel"),
            vmem_limit_bytes=vmem_limit,
        ),
    )(x_nchw, w1d, b1d)

    # (N, H, W) -> (N, 1, H, W): free (last two dims unchanged).
    return out3.reshape(N, 1, H, W)


if __name__ == "__main__":
    key = jax.random.PRNGKey(0)
    kx, kw, kb = jax.random.split(key, 3)

    N, C, H, W = 2, 4, 16, 16
    x = jax.random.normal(kx, (N, C, H, W), dtype=jnp.float32)
    # Deterministic synthetic parameters (shapes from nn.Conv2d(in_ch, 1, 1)):
    weight = jax.random.normal(kw, (1, C, 1, 1), dtype=jnp.float32) * 0.1
    bias = jax.random.normal(kb, (1,), dtype=jnp.float32) * 0.1

    out = jax.block_until_ready(conv_sig(x, weight, bias))

    # Pure-JAX reference (same math as the PyTorch module).
    ref = jax.nn.sigmoid(
        jnp.einsum("nchw,oc->nohw", x, weight.reshape(1, C))
        + bias.reshape(1, 1, 1, 1)
    )
    assert out.shape == (N, 1, H, W)
    assert jnp.allclose(out, ref, atol=2e-5, rtol=2e-5)

    print("KERNEL_OK")
</pallas_src>

<mosaic_0001>
module attributes {stable_mosaic.version = 11 : i64} {
  func.func @convsig_kernel(%arg0: i32, %arg1: i32, %arg2: i32, %arg3: memref<1x4x16x16xf32, #tpu.memory_space<vmem>>, %arg4: memref<4xf32, #tpu.memory_space<smem>>, %arg5: memref<1xf32, #tpu.memory_space<smem>>, %arg6: memref<1x16x16xf32, #tpu.memory_space<vmem>>) attributes {dimension_semantics = [#tpu.dimension_semantics<parallel>, #tpu.dimension_semantics<parallel>, #tpu.dimension_semantics<parallel>], iteration_bounds = array<i64: 2, 1, 1>, scalar_prefetch = 0 : i64, scratch_operands = 0 : i64, tpu.core_type = #tpu.core_type<tc>, window_params = [{transform_indices = @transform_0, window_bounds = array<i64: 1, 4, 16, 16>}, {transform_indices = @transform_1, window_bounds = array<i64: 4>}, {transform_indices = @transform_2, window_bounds = array<i64: 1>}, {transform_indices = @transform_3, window_bounds = array<i64: 1, 16, 16>}]} {
    %cst = arith.constant 0.000000e+00 : f32
    %0 = vector.broadcast %cst : f32 to vector<16x16xf32>
    %c0 = arith.constant 0 : index
    %1 = memref.load %arg4[%c0] : memref<4xf32, #tpu.memory_space<smem>>
    %c0_0 = arith.constant 0 : index
    %c0_1 = arith.constant 0 : index
    %c0_2 = arith.constant 0 : index
    %c0_3 = arith.constant 0 : index
    %2 = vector.load %arg3[%c0_0, %c0_1, %c0_2, %c0_3] : memref<1x4x16x16xf32, #tpu.memory_space<vmem>>, vector<1x1x16x16xf32>
    %3 = vector.shape_cast %2 : vector<1x1x16x16xf32> to vector<16x16xf32>
    %4 = vector.broadcast %1 : f32 to vector<16x16xf32>
    %5 = arith.mulf %4, %3 : vector<16x16xf32>
    %6 = arith.addf %0, %5 : vector<16x16xf32>
    %c1 = arith.constant 1 : index
    %7 = memref.load %arg4[%c1] : memref<4xf32, #tpu.memory_space<smem>>
    %c0_4 = arith.constant 0 : index
    %c1_5 = arith.constant 1 : index
    %c0_6 = arith.constant 0 : index
    %c0_7 = arith.constant 0 : index
    %8 = vector.load %arg3[%c0_4, %c1_5, %c0_6, %c0_7] : memref<1x4x16x16xf32, #tpu.memory_space<vmem>>, vector<1x1x16x16xf32>
    %9 = vector.shape_cast %8 : vector<1x1x16x16xf32> to vector<16x16xf32>
    %10 = vector.broadcast %7 : f32 to vector<16x16xf32>
    %11 = arith.mulf %10, %9 : vector<16x16xf32>
    %12 = arith.addf %6, %11 : vector<16x16xf32>
    %c2 = arith.constant 2 : index
    %13 = memref.load %arg4[%c2] : memref<4xf32, #tpu.memory_space<smem>>
    %c0_8 = arith.constant 0 : index
    %c2_9 = arith.constant 2 : index
    %c0_10 = arith.constant 0 : index
    %c0_11 = arith.constant 0 : index
    %14 = vector.load %arg3[%c0_8, %c2_9, %c0_10, %c0_11] : memref<1x4x16x16xf32, #tpu.memory_space<vmem>>, vector<1x1x16x16xf32>
    %15 = vector.shape_cast %14 : vector<1x1x16x16xf32> to vector<16x16xf32>
    %16 = vector.broadcast %13 : f32 to vector<16x16xf32>
    %17 = arith.mulf %16, %15 : vector<16x16xf32>
    %18 = arith.addf %12, %17 : vector<16x16xf32>
    %c3 = arith.constant 3 : index
    %19 = memref.load %arg4[%c3] : memref<4xf32, #tpu.memory_space<smem>>
    %c0_12 = arith.constant 0 : index
    %c3_13 = arith.constant 3 : index
    %c0_14 = arith.constant 0 : index
    %c0_15 = arith.constant 0 : index
    %20 = vector.load %arg3[%c0_12, %c3_13, %c0_14, %c0_15] : memref<1x4x16x16xf32, #tpu.memory_space<vmem>>, vector<1x1x16x16xf32>
    %21 = vector.shape_cast %20 : vector<1x1x16x16xf32> to vector<16x16xf32>
    %22 = vector.broadcast %19 : f32 to vector<16x16xf32>
    %23 = arith.mulf %22, %21 : vector<16x16xf32>
    %24 = arith.addf %18, %23 : vector<16x16xf32>
    %c0_16 = arith.constant 0 : index
    %25 = memref.load %arg5[%c0_16] : memref<1xf32, #tpu.memory_space<smem>>
    %26 = vector.broadcast %25 : f32 to vector<16x16xf32>
    %27 = arith.addf %24, %26 : vector<16x16xf32>
    %cst_17 = arith.constant 5.000000e-01 : f32
    %28 = vector.broadcast %cst_17 : f32 to vector<16x16xf32>
    %29 = arith.mulf %28, %27 : vector<16x16xf32>
    %30 = math.tanh %29 : vector<16x16xf32>
    %cst_18 = arith.constant 5.000000e-01 : f32
    %31 = vector.broadcast %cst_18 : f32 to vector<16x16xf32>
    %32 = arith.mulf %31, %30 : vector<16x16xf32>
    %cst_19 = arith.constant 5.000000e-01 : f32
    %33 = vector.broadcast %cst_19 : f32 to vector<16x16xf32>
    %34 = arith.addf %32, %33 : vector<16x16xf32>
    %c0_20 = arith.constant 0 : index
    %c0_21 = arith.constant 0 : index
    %c0_22 = arith.constant 0 : index
    %35 = vector.load %arg6[%c0_20, %c0_21, %c0_22] : memref<1x16x16xf32, #tpu.memory_space<vmem>>, vector<1x16x16xf32>
    %36 = vector.shape_cast %35 : vector<1x16x16xf32> to vector<16x16xf32>
    %37 = vector.shape_cast %34 : vector<16x16xf32> to vector<1x16x16xf32>
    tpu.vector_store %arg6[%c0_20, %c0_21, %c0_22], %37 {strides = array<i32>} : memref<1x16x16xf32, #tpu.memory_space<vmem>>, vector<1x16x16xf32>,
    return
  }
  func.func @transform_0(%arg0: i32, %arg1: i32, %arg2: i32) -> (i32, i32, i32, i32) {
    %c0_i32 = arith.constant 0 : i32
    %c0_i32_0 = arith.constant 0 : i32
    return %arg0, %c0_i32, %arg1, %arg2 : i32, i32, i32, i32
  }
  func.func @transform_1(%arg0: i32, %arg1: i32, %arg2: i32) -> i32 {
    %c0_i32 = arith.constant 0 : i32
    %c0_i32_0 = arith.constant 0 : i32
    return %c0_i32 : i32
  }
  func.func @transform_2(%arg0: i32, %arg1: i32, %arg2: i32) -> i32 {
    %c0_i32 = arith.constant 0 : i32
    %c0_i32_0 = arith.constant 0 : i32
    return %c0_i32 : i32
  }
  func.func @transform_3(%arg0: i32, %arg1: i32, %arg2: i32) -> (i32, i32, i32) {
    %c0_i32 = arith.constant 0 : i32
    return %arg0, %arg1, %arg2 : i32, i32, i32
  }
}

</mosaic_0001>

<llo_original>
// kernel: tpu_custom_call.1
$region0: #{tpu_custom_call.1}
  #allocation0 [shape = 'u32[]', space=smem, size = 0x4, offset = 0x4, fixed_abs, tag = 'smem constant byte address 0x4 - core index']
  #allocation1 [shape = 'u32[72,128]{1,0:T(1,128)}', space=vmem, size = 0x9000, scoped, tag = 'internal scratch']
  #allocation2 [shape = 'f32[1]{0:T(128)S(6)}', space=smem, size = 0x200, scoped, tag = 'scoped memory for tpu_custom_call.1']
  %s0 = inlined_call_operand.hbm [shape: f32[2,4,16,16], index: 0, kind: input, shape index: {}]
  %s1 = inlined_call_operand.vmem [shape: f32[4], index: 1, kind: input, shape index: {}]
  %s2 = inlined_call_operand.<no memory space> [shape: f32[1], index: 2, kind: input, shape index: {}]
  %s3 = inlined_call_operand.hbm [shape: f32[2,16,16], index: 3, kind: output, shape index: {}]
  %s4 = sld [smem:[#allocation0]]
  $region53: #{tpu_custom_call.1} parent=0
    _
  %s6 = ssub.s32 1, %s4
  %s7 = scalar_select 0, %s6, %s4
  %8 = sst [smem:[#allocation2]] %s2
  $region1: #{tpu_custom_call.1} parent=0
    #allocation3 [shape = 'u8[65536]{0}', space=vmem, size = 0x10000, scoped, tag = 'input window, operand 0']
    #allocation4 [shape = 's32[2]{0}', space=sflag, size = 0x8, scoped, tag = 'scoped memory for tpu_custom_call.1']
    #allocation5 [shape = 's32[2]{0}', space=sflag, size = 0x8, scoped, tag = 'scoped memory for tpu_custom_call.1']
    #allocation6 [shape = 's32[2]{0}', space=sflag, size = 0x8, scoped, tag = 'scoped memory for tpu_custom_call.1']
    #allocation7 [shape = 'u8[512]{0}', space=smem, size = 0x200, scoped, tag = 'input window, operand 1, single buffered']
    #allocation8 [shape = 'u8[16384]{0}', space=vmem, size = 0x4000, scoped, tag = 'output window, operand 0']
    %9 = vsyncpa [#allocation4], 0
    %s10 = scalar_lea.sflag [#allocation4], 1
    %11 = vsyncpa %s10, 0
    %12 = vsyncpa [#allocation6], 0
    %13 = vsyncpa [#allocation5], 0
    %s14 = scalar_lea.sflag [#allocation5], 1
    %15 = vsyncpa %s14, 0
    loop: start=0, step=1, limit=4
    $region2: #{tpu_custom_call.1} parent=1 // loop_pre_header
      _
    $region3: #{tpu_custom_call.1} parent=1 // loop_header
      %s17 = sphi 0, %s21
      %p18 = scmp.ge.s32.totalorder %s17, 4
      %s24 = sphi 0, %s43
      %s25 = sphi 0, %s39
      %s26 = sphi 0, %s35
      %s27 = sphi 0, %s24
      %s28 = sphi 0, %s25
      %s29 = sphi 0, %s26
      %s30 = sphi 0, %s27
      %s31 = sphi 0, %s28
      %s32 = sphi 0, %s29
      %s50 = sphi 0, %s52
      %s53 = sphi 0, %s50
      %s54 = sphi 0, %s53
      %s70 = sphi 0, %s54
      %s74 = sphi 0, %s74
      %s76 = sphi 0, %s74
      %s77 = sphi 0, %s76
      %s91 = sphi 0, %s77
      %s95 = sphi 0, %s95
      %s97 = sphi 0, %s95
      %s98 = sphi 0, %s97
      %s112 = sphi 0, %s98
      %s122 = sphi 0, %s124
      %s125 = sphi 0, %s122
      %s126 = sphi 0, %s125
      %s142 = sphi 0, %s126
    $region4: #{tpu_custom_call.1} parent=1 // loop_header_branch
      %20 = sbr.rel (%p18) target = $region8
    $region5: #{tpu_custom_call.1} parent=1 // loop_body
      %s22 = ssub.s32 %s17, 1
      %s23 = ssub.s32 %s17, 2
      %s33 = sadd.s32 1, %s26
      %p34 = scmp.ge.s32.totalorder %s33, 1
      %s35 = scalar_select %p34, 0, %s33
      %s36 = sadd.s32 1, %s25
      %s37 = scalar_select %p34, %s36, %s25
      %p38 = scmp.ge.s32.totalorder %s37, 1
      %s39 = scalar_select %p38, 0, %s37
      %s40 = sadd.s32 1, %s24
      %s41 = scalar_select %p38, %s40, %s24
      %p42 = scmp.ge.s32.totalorder %s41, 2
      %s43 = scalar_select %p42, 0, %s41
      %s44 = ssub.s32 %s24, %s43
      %s45 = ssub.s32 %s25, %s39
      %s46 = sor.u32 %s44, %s45
      %s47 = ssub.s32 %s26, %s35
      %s48 = sor.u32 %s46, %s47
      %p49 = scmp.eq.s32.totalorder %s48, 0
      %s51 = sadd.s32 %s50, 1
      %s52 = scalar_select %p49, %s50, %s51
      %p55 = pneg %p49
      %p56 = scmp.eq.s32.totalorder %s17, 1
      %p57 = por %p55, %p56
      %p58 = scmp.ne.s32.totalorder %s50, %s53
      %p59 = scmp.eq.s32.totalorder %s17, 0
      %p60 = por %p58, %p59
      %p61 = scmp.ne.s32.totalorder %s50, %s53
      %p62 = scmp.eq.s32.totalorder %s22, 1
      %p63 = por %p61, %p62
      %p64 = scmp.ne.s32.totalorder %s53, %s54
      %p65 = scmp.eq.s32.totalorder %s22, 0
      %p66 = por %p64, %p65
      %p67 = scmp.ne.s32.totalorder %s53, %s54
      %p68 = scmp.eq.s32.totalorder %s23, 1
      %p69 = por %p67, %p68
      %p71 = scmp.ne.s32.totalorder %s54, %s70
      %p72 = scmp.eq.s32.totalorder %s23, 0
      %p73 = por %p71, %p72
      %s75 = sadd.s32 %s74, 1
      %p78 = scmp.eq.s32.totalorder %s17, 1
      %p79 = scmp.ne.s32.totalorder %s74, %s76
      %p80 = scmp.eq.s32.totalorder %s17, 0
      %p81 = por %p79, %p80
      %p82 = scmp.ne.s32.totalorder %s74, %s76
      %p83 = scmp.eq.s32.totalorder %s22, 1
      %p84 = por %p82, %p83
      %p85 = scmp.ne.s32.totalorder %s76, %s77
      %p86 = scmp.eq.s32.totalorder %s22, 0
      %p87 = por %p85, %p86
      %p88 = scmp.ne.s32.totalorder %s76, %s77
      %p89 = scmp.eq.s32.totalorder %s23, 1
      %p90 = por %p88, %p89
      %p92 = scmp.ne.s32.totalorder %s77, %s91
      %p93 = scmp.eq.s32.totalorder %s23, 0
      %p94 = por %p92, %p93
      %s96 = sadd.s32 %s95, 1
      %p99 = scmp.eq.s32.totalorder %s17, 1
      %p100 = scmp.ne.s32.totalorder %s95, %s97
      %p101 = scmp.eq.s32.totalorder %s17, 0
      %p102 = por %p100, %p101
      %p103 = scmp.ne.s32.totalorder %s95, %s97
      %p104 = scmp.eq.s32.totalorder %s22, 1
      %p105 = por %p103, %p104
      %p106 = scmp.ne.s32.totalorder %s97, %s98
      %p107 = scmp.eq.s32.totalorder %s22, 0
      %p108 = por %p106, %p107
      %p109 = scmp.ne.s32.totalorder %s97, %s98
      %p110 = scmp.eq.s32.totalorder %s23, 1
      %p111 = por %p109, %p110
      %p113 = scmp.ne.s32.totalorder %s98, %s112
      %p114 = scmp.eq.s32.totalorder %s23, 0
      %p115 = por %p113, %p114
      %s116 = ssub.s32 %s24, %s43
      %s117 = ssub.s32 %s25, %s39
      %s118 = sor.u32 %s116, %s117
      %s119 = ssub.s32 %s26, %s35
      %s120 = sor.u32 %s118, %s119
      %p121 = scmp.eq.s32.totalorder %s120, 0
      %s123 = sadd.s32 %s122, 1
      %s124 = scalar_select %p121, %s122, %s123
      %p127 = pneg %p121
      %p128 = scmp.eq.s32.totalorder %s17, 1
      %p129 = por %p127, %p128
      %p130 = scmp.ne.s32.totalorder %s122, %s125
      %p131 = scmp.eq.s32.totalorder %s17, 0
      %p132 = por %p130, %p131
      %p133 = scmp.ne.s32.totalorder %s122, %s125
      %p134 = scmp.eq.s32.totalorder %s22, 1
      %p135 = por %p133, %p134
      %p136 = scmp.ne.s32.totalorder %s125, %s126
      %p137 = scmp.eq.s32.totalorder %s22, 0
      %p138 = por %p136, %p137
      %p139 = scmp.ne.s32.totalorder %s125, %s126
      %p140 = scmp.eq.s32.totalorder %s23, 1
      %p141 = por %p139, %p140
      %p143 = scmp.ne.s32.totalorder %s126, %s142
      %p144 = scmp.eq.s32.totalorder %s23, 0
      %p145 = por %p143, %p144
      %p146 = scmp.le.s32.totalorder 1, %s17
      %p147 = scmp.lt.s32.totalorder %s17, 3
      %p148 = pnand %p146, %p147
      %p149 = pneg %p148
      // Predicated region
      $region9: #{tpu_custom_call.1} parent=5 // pred_check
        _
      $region10: #{tpu_custom_call.1} parent=5 // pred_check_branch
        %151 = sbr.rel (%p148) target = $region12
      $region11: #{tpu_custom_call.1} parent=5 // pred_region
        %s152 = ssub.s32 %s17, 1
        // Predicated region
        $region13: #{tpu_custom_call.1} parent=11 // pred_check
          %p153 = pneg %p87
        $region14: #{tpu_custom_call.1} parent=11 // pred_check_branch
          %155 = sbr.rel (%p153) target = $region16
        $region15: #{tpu_custom_call.1} parent=11 // pred_region
          %157 = vsyncadd [#allocation6], 0
          %s159 = sshll.u32 %s1, 4
          %s160 = int_to_ptr.vmem [resolvable:$true] %s159
          %162 = dma.vmem_to_smem %s160, 16, [#allocation7], [#allocation6]
        $region16: #{tpu_custom_call.1} parent=11 // pred_fallthru
          _
        // Predicated region
        $region17: #{tpu_custom_call.1} parent=11 // pred_check
          %p163 = pneg %p108
        $region18: #{tpu_custom_call.1} parent=11 // pred_check_branch
          %165 = sbr.rel (%p163) target = $region20
        $region19: #{tpu_custom_call.1} parent=11 // pred_region
          _
        $region20: #{tpu_custom_call.1} parent=11 // pred_fallthru
          _
      $region12: #{tpu_custom_call.1} parent=5 // pred_fallthru
        _
      %p166 = scmp.lt.s32.totalorder %s17, 2
      // Predicated region
      $region21: #{tpu_custom_call.1} parent=5 // pred_check
        %p167 = pneg %p166
      $region22: #{tpu_custom_call.1} parent=5 // pred_check_branch
        %169 = sbr.rel (%p167) target = $region24
      $region23: #{tpu_custom_call.1} parent=5 // pred_region
        // Predicated region
        $region25: #{tpu_custom_call.1} parent=23 // pred_check
          %p170 = pneg %p60
        $region26: #{tpu_custom_call.1} parent=23 // pred_check_branch
          %172 = sbr.rel (%p170) target = $region28
        $region27: #{tpu_custom_call.1} parent=23 // pred_region
          %s173 = sand.u32 %s50, 1
          %s174 = scalar_lea.sflag [#allocation4], %s173
          %s175 = sand.u32 %s50, 1
          %s176 = smul.addr %s175, 64
          %s177 = scalar_lea.vmem [#allocation3], %s176
          %s178 = smul.u32 2, %s25
          %180 = vsyncadd %s174, 0
          %s181 = sadd.s32 %s26, %s178
          %s182 = smul.addr %s24, 8
          %s183 = sadd.s32 %s181, %s182
          %s184 = smul.addr %s183, 8
          %s185 = scalar_lea.hbm %s0, %s184
          %s186 = sshll.u32 %s185, 4
          %s187 = int_to_ptr.hbm [resolvable:$true] %s186
          %s188 = sshll.u32 %s177, 4
          %s189 = int_to_ptr.vmem [resolvable:$true] %s188
          %194 = dma.hbm_to_vmem [thread:$0]  %s187, 1024, %s189, %s174, 128, 128, 8
        $region28: #{tpu_custom_call.1} parent=23 // pred_fallthru
          _
      $region24: #{tpu_custom_call.1} parent=5 // pred_fallthru
        _
      %p195 = scmp.le.s32.totalorder 1, %s17
      %p196 = scmp.lt.s32.totalorder %s17, 3
      %p197 = pnand %p195, %p196
      %p198 = pneg %p197
      // Predicated region
      $region29: #{tpu_custom_call.1} parent=5 // pred_check
        _
      $region30: #{tpu_custom_call.1} parent=5 // pred_check_branch
        %200 = sbr.rel (%p197) target = $region32
      $region31: #{tpu_custom_call.1} parent=5 // pred_region
        %s201 = ssub.s32 %s17, 1
        %s202 = sand.u32 %s53, 1
        %s203 = scalar_lea.sflag [#allocation4], %s202
        %s204 = sand.u32 %s53, 1
        %s205 = smul.addr %s204, 64
        %s206 = scalar_lea.vmem [#allocation3], %s205
        // Predicated region
        $region33: #{tpu_custom_call.1} parent=31 // pred_check
          %p207 = pneg %p66
        $region34: #{tpu_custom_call.1} parent=31 // pred_check_branch
          %209 = sbr.rel (%p207) target = $region36
        $region35: #{tpu_custom_call.1} parent=31 // pred_region
          %211 = dma.done %s203, 1024
        $region36: #{tpu_custom_call.1} parent=31 // pred_fallthru
          _
        // Predicated region
        $region37: #{tpu_custom_call.1} parent=31 // pred_check
          %p212 = pneg %p87
        $region38: #{tpu_custom_call.1} parent=31 // pred_check_branch
          %214 = sbr.rel (%p212) target = $region40
        $region39: #{tpu_custom_call.1} parent=31 // pred_region
          %216 = dma.done [#allocation6], 16
        $region40: #{tpu_custom_call.1} parent=31 // pred_fallthru
          _
        %217 = sfence
        %s218 = sand.u32 %s53, 1
        %s219 = scalar_lea.sflag [#allocation4], %s218
        %s220 = sand.u32 %s53, 1
        %s221 = smul.addr %s220, 64
        %s222 = scalar_lea.vmem [#allocation3], %s221
        %p223 = pneg %p66
        %p224 = pneg %p63
        %p225 = pneg %p87
        %p226 = pneg %p84
        %p227 = pneg %p108
        %p228 = pneg %p105
        %p229 = pneg %p138
        %p230 = pneg %p135
        %s231 = sand.u32 %s125, 1
        %s232 = scalar_lea.sflag [#allocation5], %s231
        %s233 = sand.u32 %s125, 1
        %s234 = smul.addr %s233, 16
        %s235 = scalar_lea.vmem [#allocation8], %s234
        %s236 = smul.u32 2, %s28
        %s237 = smul.u32 2, %s28
        %s238 = sld [smem:[#allocation7]]
        %v239 = vld [vmem:[%s206] sm:$0xff]
        %v240 = vld [vmem:[%s206 + $0x8] sm:$0xff]
        %v241 = vstv %s238
        %v242 = vmul.f32 %v241, %v239
        %v243 = vmul.f32 %v241, %v240
        %v244 = vadd.f32 %v242, 0.0
        %v245 = vadd.f32 %v243, 0.0
        %s246 = sld [smem:[#allocation7 + $0x1]]
        %s247 = scalar_lea.vmem %s206, 16 [#allocation3]
        %v248 = vld [vmem:[%s247] sm:$0xff]
        %v249 = vld [vmem:[%s247 + $0x8] sm:$0xff]
        %v250 = vstv %s246
        %v251 = vmul.f32 %v250, %v248
        %v252 = vmul.f32 %v250, %v249
        %v253 = vadd.f32 %v244, %v251
        %v254 = vadd.f32 %v245, %v252
        %s255 = sld [smem:[#allocation7 + $0x2]]
        %s256 = scalar_lea.vmem %s206, 32 [#allocation3]
        %v257 = vld [vmem:[%s256] sm:$0xff]
        %v258 = vld [vmem:[%s256 + $0x8] sm:$0xff]
        %v259 = vstv %s255
        %v260 = vmul.f32 %v259, %v257
        %v261 = vmul.f32 %v259, %v258
        %v262 = vadd.f32 %v253, %v260
        %v263 = vadd.f32 %v254, %v261
        %s264 = sld [smem:[#allocation7 + $0x3]]
        %s265 = scalar_lea.vmem %s206, 48 [#allocation3]
        %v266 = vld [vmem:[%s265] sm:$0xff]
        %v267 = vld [vmem:[%s265 + $0x8] sm:$0xff]
        %v268 = vstv %s264
        %v269 = vmul.f32 %v268, %v266
        %v270 = vmul.f32 %v268, %v267
        %v271 = vadd.f32 %v262, %v269
        %v272 = vadd.f32 %v263, %v270
        %s273 = sld [smem:[#allocation2]]
        %v274 = vstv %s273
        %v275 = vadd.f32 %v271, %v274
        %v276 = vadd.f32 %v272, %v274
        %v277 = vmul.f32 %v275, 0.5
        %v278 = vmul.f32 %v276, 0.5
        %v279 = vtanh.pop %v277
        %v280 = vtanh.pop %v278
        %v281 = vmul.f32 %v279, 0.5
        %v282 = vmul.f32 %v280, 0.5
        %v283 = vadd.f32 %v281, 0.5
        %v284 = vadd.f32 %v282, 0.5
        %vm285 = vcmask 130048
        %286 = vst.msk [vmem:[%s235] sm:$0xff] %vm285, %v283
        %287 = vst.msk [vmem:[%s235 + $0x8] sm:$0xff] %vm285, %v284
        %s288 = sand.u32 %s125, 1
        %s289 = scalar_lea.sflag [#allocation5], %s288
        %s290 = sand.u32 %s125, 1
        %s291 = smul.addr %s290, 16
        %s292 = scalar_lea.vmem [#allocation8], %s291
        // Predicated region
        $region41: #{tpu_custom_call.1} parent=31 // pred_check
          %p293 = pneg %p135
        $region42: #{tpu_custom_call.1} parent=31 // pred_check_branch
          %295 = sbr.rel (%p293) target = $region44
        $region43: #{tpu_custom_call.1} parent=31 // pred_region
          %s296 = smul.u32 2, %s28
          %298 = vsyncadd %s289, 0
          %s299 = sadd.s32 %s29, %s296
          %s300 = smul.addr %s27, 2
          %s301 = sadd.s32 %s299, %s300
          %s302 = smul.addr %s301, 8
          %s303 = scalar_lea.hbm %s3, %s302
          %s304 = sshll.u32 %s292, 4
          %s305 = int_to_ptr.vmem [resolvable:$true] %s304
          %s306 = sshll.u32 %s303, 4
          %s307 = int_to_ptr.hbm [resolvable:$true] %s306
          %312 = dma.vmem_to_hbm [thread:$0]  %s305, 256, %s307, %s289, 128, 128, 8
        $region44: #{tpu_custom_call.1} parent=31 // pred_fallthru
          _
      $region32: #{tpu_custom_call.1} parent=5 // pred_fallthru
        _
      %p313 = scmp.le.s32.totalorder 2, %s17
      // Predicated region
      $region45: #{tpu_custom_call.1} parent=5 // pred_check
        %p314 = pneg %p313
      $region46: #{tpu_custom_call.1} parent=5 // pred_check_branch
        %316 = sbr.rel (%p314) target = $region48
      $region47: #{tpu_custom_call.1} parent=5 // pred_region
        %s317 = ssub.s32 %s17, 2
        // Predicated region
        $region49: #{tpu_custom_call.1} parent=47 // pred_check
          %p318 = pneg %p141
        $region50: #{tpu_custom_call.1} parent=47 // pred_check_branch
          %320 = sbr.rel (%p318) target = $region52
        $region51: #{tpu_custom_call.1} parent=47 // pred_region
          %s321 = sand.u32 %s126, 1
          %s322 = scalar_lea.sflag [#allocation5], %s321
          %s323 = sand.u32 %s126, 1
          %s324 = smul.addr %s323, 16
          %s325 = scalar_lea.vmem [#allocation8], %s324
          %327 = dma.done %s322, 256
        $region52: #{tpu_custom_call.1} parent=47 // pred_fallthru
          _
      $region48: #{tpu_custom_call.1} parent=5 // pred_fallthru
        _
    $region6: #{tpu_custom_call.1} parent=1 // loop_footer
      %s21 = sadd.s32 1, %s17
    $region7: #{tpu_custom_call.1} parent=1 // loop_footer_branch
      %16 = sbr.rel target = $region3
    $region8: #{tpu_custom_call.1} parent=1 // loop_exit
      _
    %328 = vsyncpa [#allocation4], 1
    %s329 = scalar_lea.sflag [#allocation4], 1
    %330 = vsyncpa %s329, 1
    %331 = vsyncpa [#allocation5], 1
    %s332 = scalar_lea.sflag [#allocation5], 1
    %333 = vsyncpa %s332, 1
    %334 = vsyncpa [#allocation6], 1
    %s335 = scalar_lea.sflag [#allocation6], 1
    %336 = vsyncpa %s335, 1

</llo_original>
